<compile_context>
chip_gen: v6e
topology: v6e:2x2x1
jax: 0.10.0
libtpu: 0.0.40
codegen_flags: <defaults>
</compile_context>

<pallas_src>
import functools

import jax
import jax.numpy as jnp
from jax import lax
from jax.experimental import pallas as pl
from jax.experimental.pallas import tpu as pltpu

LANES = 128


def _round_up(a, b):
    return (a + b - 1) // b * b


def _block_budget_bytes():
    """Per-block VMEM byte budget (and optional vmem_limit_bytes) by TPU generation.

    4 pipeline buffers (in + out, double-buffered) of this size must fit the scoped
    VMEM limit: v5e default 16 MiB, v6e/v7x default 32 MiB (v7x physical is 64 MiB).
    """
    try:
        kind = jax.devices()[0].device_kind.lower()
    except Exception:  # pragma: no cover - backend query failure
        kind = ""
    if "v6" in kind:
        return 6 << 20, 64 << 20          # 24 MiB of buffers, raised limit
    if "v5" in kind:
        return 2 << 20, None              # 8 MiB of buffers, under 16 MiB default
    return 4 << 20, None                  # v7x / v4 / unknown: 16 MiB, under 32 MiB


def _sublane_multiple(itemsize):
    return {4: 8, 2: 16, 1: 32}.get(itemsize, 8)


def _pick_cols(n, sub, target_cols=2048):
    """Pick a lane-dense column count: multiple of 128 that divides n (copy-free
    reshape).  Prefer layouts that leave >= 2*sub rows so the grid can have >= 2
    steps (megacore), then >= sub rows, then anything."""
    hi = min(target_cols, n)
    cands = [c for c in range(LANES, hi + 1, LANES) if n % c == 0]
    if not cands:
        return None
    for min_rows in (2 * sub, sub, 1):
        good = [c for c in cands if n // c >= min_rows]
        if good:
            return max(good)
    return max(cands)


def _choose_block_rows(rows, cols, itemsize, sub, block_budget):
    bytes_per_row = cols * itemsize
    budget_rows = max(sub, (block_budget // bytes_per_row) // sub * sub)
    block_rows = min(rows, budget_rows)
    if block_rows < rows:
        block_rows = max(sub, (block_rows // sub) * sub)
    # Guarantee >= 2 grid steps whenever rows allow it, so dimension_semantics
    # ("parallel",) can shard across v7x's two TensorCores.
    if rows >= 2 * sub:
        half = -(-rows // 2)                  # ceil(rows / 2)
        half = _round_up(half, sub)
        block_rows = min(block_rows, half)
    return block_rows


def _dropout_kernel(seed_ref, x_ref, o_ref, *, thresh31, thresh32, scale,
                    use_hw_prng):
    shape = x_ref.shape
    if use_hw_prng:
        # Hardware PRNG: ~1 vector op / element.  program_id decorrelates tiles.
        pltpu.prng_seed(seed_ref[0] + pl.program_id(0))
        bits = pltpu.prng_random_bits(shape)
        # Mask the sign bit -> uniform over [0, 2^31) regardless of the primitive's
        # int32/uint32 return dtype; compare against a 31-bit threshold.
        bits = jnp.bitwise_and(bits, jnp.asarray(0x7FFFFFFF, dtype=bits.dtype))
        keep = bits >= jnp.asarray(thresh31, dtype=bits.dtype)
    else:
        # Fallback: stateless counter hash (pure VPU int ops, lowers everywhere).
        block_rows, block_cols = shape
        r = lax.broadcasted_iota(jnp.int32, shape, 0).astype(jnp.uint32)
        c = lax.broadcasted_iota(jnp.int32, shape, 1).astype(jnp.uint32)
        local = r * jnp.uint32(block_cols) + c
        # Per-tile seed mixing happens once on the scalar unit, not per element.
        s = (seed_ref[0].astype(jnp.uint32)
             ^ (pl.program_id(0).astype(jnp.uint32) * jnp.uint32(0x9E3779B9)))
        h = local ^ s
        h = (h ^ (h >> 16)) * jnp.uint32(0x7FEB352D)
        h = (h ^ (h >> 15)) * jnp.uint32(0x846CA68B)
        h = h ^ (h >> 16)
        keep = h >= jnp.uint32(thresh32)

    # Native-dtype math (no f32 round trip); select folded with the scale multiply.
    scaled = x_ref[...] * jnp.asarray(scale, dtype=x_ref.dtype)
    o_ref[...] = jnp.where(keep, scaled, jnp.zeros_like(scaled))


def _dropout_2d(x2d, p, seed, use_hw_prng):
    rows, cols = x2d.shape
    itemsize = jnp.dtype(x2d.dtype).itemsize
    sub = _sublane_multiple(itemsize)
    block_budget, vmem_limit = _block_budget_bytes()
    block_rows = _choose_block_rows(rows, cols, itemsize, sub, block_budget)
    grid = pl.cdiv(rows, block_rows)

    thresh31 = min(int(round(p * float(1 << 31))), (1 << 31) - 1)
    thresh32 = min(int(round(p * float(1 << 32))), (1 << 32) - 1)
    scale = 1.0 / (1.0 - p)
    seed_arr = jnp.asarray([seed], dtype=jnp.int32)
    n_bytes = rows * cols * itemsize

    kernel = functools.partial(
        _dropout_kernel,
        thresh31=thresh31,
        thresh32=thresh32,
        scale=scale,
        use_hw_prng=use_hw_prng,
    )

    return pl.pallas_call(
        kernel,
        out_shape=jax.ShapeDtypeStruct((rows, cols), x2d.dtype),
        grid_spec=pltpu.PrefetchScalarGridSpec(
            num_scalar_prefetch=1,                            # seed -> SMEM
            grid=(grid,),
            in_specs=[pl.BlockSpec((block_rows, cols), lambda i, sref: (i, 0))],
            out_specs=pl.BlockSpec((block_rows, cols), lambda i, sref: (i, 0)),
        ),
        compiler_params=pltpu.CompilerParams(
            dimension_semantics=("parallel",),                # no cross-step state
            vmem_limit_bytes=vmem_limit,
        ),
        cost_estimate=pl.CostEstimate(
            flops=rows * cols, transcendentals=0, bytes_accessed=2 * n_bytes),
    )(seed_arr, x2d)


def dropout_dpp_forward(x, p, seed):
    """Equivalent of DropoutDPP.forward for the training / 4-D-eval path:
    F.dropout(x, p, training=True).  Same shape & dtype as x."""
    p = float(p)
    if p <= 0.0:
        return x
    if p >= 1.0:
        return jnp.zeros_like(x)

    orig_shape = x.shape
    n = x.size
    itemsize = jnp.dtype(x.dtype).itemsize
    sub = _sublane_multiple(itemsize)

    cols = _pick_cols(n, sub)
    if cols is not None:
        # Copy-free reshape to a lane-dense 2-D slab (cols % 128 == 0, divides n).
        x2d = x.reshape(n // cols, cols)
        pad = 0
    else:
        # Ragged size (n % 128 != 0): rare for NN activations; pad the flat view.
        cols = LANES
        rows = pl.cdiv(n, cols)
        rows_pad = _round_up(rows, sub)
        pad = rows_pad * cols - n
        x2d = jnp.pad(x.reshape(-1), (0, pad)).reshape(rows_pad, cols)

    try:
        out2d = jax.block_until_ready(_dropout_2d(x2d, p, seed, use_hw_prng=True))
    except Exception:
        # Hardware-PRNG primitives unavailable on this backend/lowering path;
        # fall back to the stateless software hash kernel.
        out2d = _dropout_2d(x2d, p, seed, use_hw_prng=False)

    if pad:
        return out2d.reshape(-1)[:n].reshape(orig_shape)
    return out2d.reshape(orig_shape)


if __name__ == "__main__":
    key = jax.random.PRNGKey(0)
    # NCHW input, matching the PyTorch module's 4-D case.
    x = jax.random.normal(key, (2, 4, 16, 16), dtype=jnp.float32)
    p = 0.2

    y = dropout_dpp_forward(x, p, seed=1234)
    y = jax.block_until_ready(y)

    # Sanity: shape/dtype preserved; surviving elements are exactly x / (1-p);
    # some elements dropped, some kept.
    assert y.shape == x.shape and y.dtype == x.dtype
    kept = y != 0.0
    expected = x / (1.0 - p)
    assert bool(
        jnp.allclose(
            jnp.where(kept, y, 0.0),
            jnp.where(kept, expected, 0.0),
            rtol=1e-5,
            atol=1e-6,
        )
    )
    frac_dropped = float(1.0 - jnp.mean(kept.astype(jnp.float32)))
    assert 0.05 < frac_dropped < 0.5, frac_dropped
    print("KERNEL_OK")
</pallas_src>

<mosaic_0001>
module attributes {stable_mosaic.version = 11 : i64} {
  func.func @_dropout_kernel(%arg0: i32, %arg1: memref<1xi32, #tpu.memory_space<smem>>, %arg2: memref<8x128xf32, #tpu.memory_space<vmem>>, %arg3: memref<8x128xf32, #tpu.memory_space<vmem>>) attributes {dimension_semantics = [#tpu.dimension_semantics<parallel>], iteration_bounds = array<i64: 2>, scalar_prefetch = 1 : i64, scratch_operands = 0 : i64, tpu.core_type = #tpu.core_type<tc>, window_params = [{transform_indices = @transform_0, window_bounds = array<i64: 8, 128>}, {transform_indices = @transform_1, window_bounds = array<i64: 8, 128>}]} {
    %c0 = arith.constant 0 : index
    %0 = memref.load %arg1[%c0] : memref<1xi32, #tpu.memory_space<smem>>
    %1 = arith.addi %0, %arg0 : i32
    "tpu.prng_set_seed_32"(%1) : (i32) -> ()
    %2 = "tpu.prng_random_bits"() : () -> vector<8x128xi32>
    %c2147483647_i32 = arith.constant 2147483647 : i32
    %3 = vector.broadcast %c2147483647_i32 : i32 to vector<8x128xi32>
    %4 = arith.andi %2, %3 : vector<8x128xi32>
    %c429496730_i32 = arith.constant 429496730 : i32
    %5 = vector.broadcast %c429496730_i32 : i32 to vector<8x128xi32>
    %6 = arith.cmpi sge, %4, %5 : vector<8x128xi32>
    %c0_0 = arith.constant 0 : index
    %c0_1 = arith.constant 0 : index
    %7 = vector.load %arg2[%c0_0, %c0_1] : memref<8x128xf32, #tpu.memory_space<vmem>>, vector<8x128xf32>
    %cst = arith.constant 1.250000e+00 : f32
    %8 = vector.broadcast %cst : f32 to vector<8x128xf32>
    %9 = arith.mulf %7, %8 : vector<8x128xf32>
    %cst_2 = arith.constant 0.000000e+00 : f32
    %10 = vector.broadcast %cst_2 : f32 to vector<8x128xf32>
    %11 = arith.select %6, %9, %10 : vector<8x128xi1>, vector<8x128xf32>
    %c0_3 = arith.constant 0 : index
    %c0_4 = arith.constant 0 : index
    %12 = vector.load %arg3[%c0_3, %c0_4] : memref<8x128xf32, #tpu.memory_space<vmem>>, vector<8x128xf32>
    tpu.vector_store %arg3[%c0_3, %c0_4], %11 {strides = array<i32>} : memref<8x128xf32, #tpu.memory_space<vmem>>, vector<8x128xf32>,
    return
  }
  func.func @transform_0(%arg0: i32, %arg1: memref<1xi32, #tpu.memory_space<smem>>) -> (i32, i32) {
    %c0_i32 = arith.constant 0 : i32
    %c0_i32_0 = arith.constant 0 : i32
    return %arg0, %c0_i32 : i32, i32
  }
  func.func @transform_1(%arg0: i32, %arg1: memref<1xi32, #tpu.memory_space<smem>>) -> (i32, i32) {
    %c0_i32 = arith.constant 0 : i32
    %c0_i32_0 = arith.constant 0 : i32
    return %arg0, %c0_i32 : i32, i32
  }
}

module attributes {stable_mosaic.version = 11 : i64} {
  func.func @_dropout_kernel(%arg0: i32, %arg1: memref<1xi32, #tpu.memory_space<smem>>, %arg2: memref<8x128xf32, #tpu.memory_space<vmem>>, %arg3: memref<8x128xf32, #tpu.memory_space<vmem>>) attributes {dimension_semantics = [#tpu.dimension_semantics<parallel>], iteration_bounds = array<i64: 2>, scalar_prefetch = 1 : i64, scratch_operands = 0 : i64, tpu.core_type = #tpu.core_type<tc>, window_params = [{transform_indices = @transform_0, window_bounds = array<i64: 8, 128>}, {transform_indices = @transform_1, window_bounds = array<i64: 8, 128>}]} {
    %0 = tpu.iota {dimensions = array<i32: 0>} : vector<8x128xi32>
    %1 = tpu.iota {dimensions = array<i32: 1>} : vector<8x128xi32>
    %c128_i32 = arith.constant 128 : i32
    %2 = vector.broadcast %c128_i32 : i32 to vector<8x128xi32>
    %3 = arith.muli %0, %2 : vector<8x128xi32>
    %4 = arith.addi %3, %1 : vector<8x128xi32>
    %c0 = arith.constant 0 : index
    %5 = memref.load %arg1[%c0] : memref<1xi32, #tpu.memory_space<smem>>
    %c-1640531527_i32 = arith.constant -1640531527 : i32
    %6 = arith.muli %arg0, %c-1640531527_i32 : i32
    %7 = arith.xori %5, %6 : i32
    %8 = vector.broadcast %7 : i32 to vector<8x128xi32>
    %9 = arith.xori %4, %8 : vector<8x128xi32>
    %c16_i32 = arith.constant 16 : i32
    %10 = vector.broadcast %c16_i32 : i32 to vector<8x128xi32>
    %11 = arith.shrui %9, %10 : vector<8x128xi32>
    %12 = arith.xori %9, %11 : vector<8x128xi32>
    %c2146121005_i32 = arith.constant 2146121005 : i32
    %13 = vector.broadcast %c2146121005_i32 : i32 to vector<8x128xi32>
    %14 = arith.muli %12, %13 : vector<8x128xi32>
    %c15_i32 = arith.constant 15 : i32
    %15 = vector.broadcast %c15_i32 : i32 to vector<8x128xi32>
    %16 = arith.shrui %14, %15 : vector<8x128xi32>
    %17 = arith.xori %14, %16 : vector<8x128xi32>
    %c-2073254261_i32 = arith.constant -2073254261 : i32
    %18 = vector.broadcast %c-2073254261_i32 : i32 to vector<8x128xi32>
    %19 = arith.muli %17, %18 : vector<8x128xi32>
    %c16_i32_0 = arith.constant 16 : i32
    %20 = vector.broadcast %c16_i32_0 : i32 to vector<8x128xi32>
    %21 = arith.shrui %19, %20 : vector<8x128xi32>
    %22 = arith.xori %19, %21 : vector<8x128xi32>
    %c858993459_i32 = arith.constant 858993459 : i32
    %23 = vector.broadcast %c858993459_i32 : i32 to vector<8x128xi32>
    %24 = arith.cmpi uge, %22, %23 : vector<8x128xi32>
    %c0_1 = arith.constant 0 : index
    %c0_2 = arith.constant 0 : index
    %25 = vector.load %arg2[%c0_1, %c0_2] : memref<8x128xf32, #tpu.memory_space<vmem>>, vector<8x128xf32>
    %cst = arith.constant 1.250000e+00 : f32
    %26 = vector.broadcast %cst : f32 to vector<8x128xf32>
    %27 = arith.mulf %25, %26 : vector<8x128xf32>
    %cst_3 = arith.constant 0.000000e+00 : f32
    %28 = vector.broadcast %cst_3 : f32 to vector<8x128xf32>
    %29 = arith.select %24, %27, %28 : vector<8x128xi1>, vector<8x128xf32>
    %c0_4 = arith.constant 0 : index
    %c0_5 = arith.constant 0 : index
    %30 = vector.load %arg3[%c0_4, %c0_5] : memref<8x128xf32, #tpu.memory_space<vmem>>, vector<8x128xf32>
    tpu.vector_store %arg3[%c0_4, %c0_5], %29 {strides = array<i32>} : memref<8x128xf32, #tpu.memory_space<vmem>>, vector<8x128xf32>,
    return
  }
  func.func @transform_0(%arg0: i32, %arg1: memref<1xi32, #tpu.memory_space<smem>>) -> (i32, i32) {
    %c0_i32 = arith.constant 0 : i32
    %c0_i32_0 = arith.constant 0 : i32
    return %arg0, %c0_i32 : i32, i32
  }
  func.func @transform_1(%arg0: i32, %arg1: memref<1xi32, #tpu.memory_space<smem>>) -> (i32, i32) {
    %c0_i32 = arith.constant 0 : i32
    %c0_i32_0 = arith.constant 0 : i32
    return %arg0, %c0_i32 : i32, i32
  }
}

</mosaic_0001>

<llo_original>
// kernel: tpu_custom_call.1
$region0: #{tpu_custom_call.1}
  #allocation0 [shape = 'u32[]', space=smem, size = 0x4, offset = 0x4, fixed_abs, tag = 'smem constant byte address 0x4 - core index']
  #allocation1 [shape = 'u32[144,128]{1,0:T(1,128)}', space=vmem, size = 0x12000, scoped, tag = 'internal scratch']
  #allocation2 [shape = 's32[1]{0}', space=sflag, size = 0x4, scoped, tag = 'scoped memory for tpu_custom_call.1']
  #allocation3 [shape = 's32[1]{0:T(128)S(6)}', space=smem, size = 0x200, scoped, tag = 'prefetched SMEM operand 0']
  %s0 = inlined_call_operand.<no memory space> [shape: s32[1], index: 0, kind: input, shape index: {}]
  %s1 = inlined_call_operand.hbm [shape: f32[16,128], index: 1, kind: input, shape index: {}]
  %s2 = inlined_call_operand.hbm [shape: f32[16,128], index: 2, kind: output, shape index: {}]
  %s3 = sld [smem:[#allocation0]]
  $region41: #{tpu_custom_call.1} parent=0
    _
  %s5 = ssub.s32 1, %s3
  %s6 = scalar_select 0, %s5, %s3
  %7 = sst [smem:[#allocation3]] %s0
  $region1: #{tpu_custom_call.1} parent=0
    #allocation4 [shape = 'u8[8192]{0}', space=vmem, size = 0x2000, scoped, tag = 'input window, operand 1']
    #allocation5 [shape = 's32[2]{0}', space=sflag, size = 0x8, scoped, tag = 'scoped memory for tpu_custom_call.1']
    #allocation6 [shape = 's32[2]{0}', space=sflag, size = 0x8, scoped, tag = 'scoped memory for tpu_custom_call.1']
    #allocation7 [shape = 'u8[8192]{0}', space=vmem, size = 0x2000, scoped, tag = 'output window, operand 0']
    %8 = vsyncpa [#allocation5], 0
    %s9 = scalar_lea.sflag [#allocation5], 1
    %10 = vsyncpa %s9, 0
    %11 = vsyncpa [#allocation6], 0
    %s12 = scalar_lea.sflag [#allocation6], 1
    %13 = vsyncpa %s12, 0
    loop: start=0, step=1, limit=4
    $region2: #{tpu_custom_call.1} parent=1 // loop_pre_header
      _
    $region3: #{tpu_custom_call.1} parent=1 // loop_header
      %s15 = sphi 0, %s19
      %p16 = scmp.ge.s32.totalorder %s15, 4
      %s25 = sphi 0, %s27
      %s28 = sphi 0, %s25
      %s29 = sphi 0, %s28
      %s45 = sphi 0, %s29
      %s51 = sphi 0, %s53
      %s54 = sphi 0, %s51
      %s55 = sphi 0, %s54
      %s71 = sphi 0, %s55
    $region4: #{tpu_custom_call.1} parent=1 // loop_header_branch
      %18 = sbr.rel (%p16) target = $region8
    $region5: #{tpu_custom_call.1} parent=1 // loop_body
      %s20 = ssub.s32 %s15, 1
      %s21 = ssub.s32 %s15, 2
      %s22 = sadd.s32 %s15, 1
      %s23 = ssub.s32 %s15, %s22
      %p24 = scmp.eq.s32.totalorder %s23, 0
      %s26 = sadd.s32 %s25, 1
      %s27 = scalar_select %p24, %s25, %s26
      %p30 = pneg %p24
      %p31 = scmp.eq.s32.totalorder %s15, 1
      %p32 = por %p30, %p31
      %p33 = scmp.ne.s32.totalorder %s25, %s28
      %p34 = scmp.eq.s32.totalorder %s15, 0
      %p35 = por %p33, %p34
      %p36 = scmp.ne.s32.totalorder %s25, %s28
      %p37 = scmp.eq.s32.totalorder %s20, 1
      %p38 = por %p36, %p37
      %p39 = scmp.ne.s32.totalorder %s28, %s29
      %p40 = scmp.eq.s32.totalorder %s20, 0
      %p41 = por %p39, %p40
      %p42 = scmp.ne.s32.totalorder %s28, %s29
      %p43 = scmp.eq.s32.totalorder %s21, 1
      %p44 = por %p42, %p43
      %p46 = scmp.ne.s32.totalorder %s29, %s45
      %p47 = scmp.eq.s32.totalorder %s21, 0
      %p48 = por %p46, %p47
      %s49 = ssub.s32 %s15, %s22
      %p50 = scmp.eq.s32.totalorder %s49, 0
      %s52 = sadd.s32 %s51, 1
      %s53 = scalar_select %p50, %s51, %s52
      %p56 = pneg %p50
      %p57 = scmp.eq.s32.totalorder %s15, 1
      %p58 = por %p56, %p57
      %p59 = scmp.ne.s32.totalorder %s51, %s54
      %p60 = scmp.eq.s32.totalorder %s15, 0
      %p61 = por %p59, %p60
      %p62 = scmp.ne.s32.totalorder %s51, %s54
      %p63 = scmp.eq.s32.totalorder %s20, 1
      %p64 = por %p62, %p63
      %p65 = scmp.ne.s32.totalorder %s54, %s55
      %p66 = scmp.eq.s32.totalorder %s20, 0
      %p67 = por %p65, %p66
      %p68 = scmp.ne.s32.totalorder %s54, %s55
      %p69 = scmp.eq.s32.totalorder %s21, 1
      %p70 = por %p68, %p69
      %p72 = scmp.ne.s32.totalorder %s55, %s71
      %p73 = scmp.eq.s32.totalorder %s21, 0
      %p74 = por %p72, %p73
      %p75 = scmp.le.s32.totalorder 1, %s15
      %p76 = scmp.lt.s32.totalorder %s15, 3
      %p77 = pnand %p75, %p76
      %p78 = pneg %p77
      // Predicated region
      $region9: #{tpu_custom_call.1} parent=5 // pred_check
        _
      $region10: #{tpu_custom_call.1} parent=5 // pred_check_branch
        %80 = sbr.rel (%p77) target = $region12
      $region11: #{tpu_custom_call.1} parent=5 // pred_region
        %s81 = ssub.s32 %s15, 1
      $region12: #{tpu_custom_call.1} parent=5 // pred_fallthru
        _
      %p82 = scmp.lt.s32.totalorder %s15, 2
      // Predicated region
      $region13: #{tpu_custom_call.1} parent=5 // pred_check
        %p83 = pneg %p82
      $region14: #{tpu_custom_call.1} parent=5 // pred_check_branch
        %85 = sbr.rel (%p83) target = $region16
      $region15: #{tpu_custom_call.1} parent=5 // pred_region
        // Predicated region
        $region17: #{tpu_custom_call.1} parent=15 // pred_check
          %p86 = pneg %p35
        $region18: #{tpu_custom_call.1} parent=15 // pred_check_branch
          %88 = sbr.rel (%p86) target = $region20
        $region19: #{tpu_custom_call.1} parent=15 // pred_region
          %s89 = sand.u32 %s25, 1
          %s90 = scalar_lea.sflag [#allocation5], %s89
          %s91 = sand.u32 %s25, 1
          %s92 = smul.addr %s91, 8
          %s93 = scalar_lea.vmem [#allocation4], %s92
          %s95 = ssub.s32 128, 128
          %96 = vsyncadd %s90, %s95
          %s97 = smul.addr %s15, 128
          %s98 = scalar_lea.hbm %s1, %s97
          %s100 = sshll.u32 %s93, 4
          %s101 = int_to_ptr.vmem [resolvable:$true] %s100
          %103 = dma.hbm_to_vmem [thread:$0]  %s98, 128, %s101, %s90
        $region20: #{tpu_custom_call.1} parent=15 // pred_fallthru
          _
      $region16: #{tpu_custom_call.1} parent=5 // pred_fallthru
        _
      %p104 = scmp.le.s32.totalorder 1, %s15
      %p105 = scmp.lt.s32.totalorder %s15, 3
      %p106 = pnand %p104, %p105
      %p107 = pneg %p106
      // Predicated region
      $region21: #{tpu_custom_call.1} parent=5 // pred_check
        _
      $region22: #{tpu_custom_call.1} parent=5 // pred_check_branch
        %109 = sbr.rel (%p106) target = $region24
      $region23: #{tpu_custom_call.1} parent=5 // pred_region
        %s110 = ssub.s32 %s15, 1
        %s111 = sand.u32 %s28, 1
        %s112 = scalar_lea.sflag [#allocation5], %s111
        %s113 = sand.u32 %s28, 1
        %s114 = smul.addr %s113, 8
        %s115 = scalar_lea.vmem [#allocation4], %s114
        // Predicated region
        $region25: #{tpu_custom_call.1} parent=23 // pred_check
          %p116 = pneg %p41
        $region26: #{tpu_custom_call.1} parent=23 // pred_check_branch
          %118 = sbr.rel (%p116) target = $region28
        $region27: #{tpu_custom_call.1} parent=23 // pred_region
          %119 = dma.done %s112, 128
        $region28: #{tpu_custom_call.1} parent=23 // pred_fallthru
          _
        %s120 = sand.u32 %s28, 1
        %s121 = scalar_lea.sflag [#allocation5], %s120
        %s122 = sand.u32 %s28, 1
        %s123 = smul.addr %s122, 8
        %s124 = scalar_lea.vmem [#allocation4], %s123
        %p125 = pneg %p41
        %p126 = pneg %p38
        %p127 = pneg %p67
        %p128 = pneg %p64
        %s129 = sand.u32 %s54, 1
        %s130 = scalar_lea.sflag [#allocation6], %s129
        %s131 = sand.u32 %s54, 1
        %s132 = smul.addr %s131, 8
        %s133 = scalar_lea.vmem [#allocation7], %s132
        %s134 = sld [smem:[#allocation3]]
        %s135 = sadd.s32 %s134, %s20
        %v136 = vlaneseq
        %v137 = vstv %s135
        %v138 = vxor.u32 %v137, %v137
        %v139 = vxor.u32 %v138, 466688986
        %v140 = vadd.s32 %v136, %v137
        %v141 = vadd.s32 %v140, %v140
        %v142 = vshll.u32 %v140, 13
        %v143 = vshrl.u32 %v140, 19
        %v144 = vor.u32 %v142, %v143
        %v145 = vxor.u32 %v141, %v144
        %v146 = vadd.s32 %v141, %v145
        %v147 = vshll.u32 %v145, 15
        %v148 = vshrl.u32 %v145, 17
        %v149 = vor.u32 %v147, %v148
        %v150 = vxor.u32 %v146, %v149
        %v151 = vadd.s32 %v146, %v150
        %v152 = vshll.u32 %v150, 26
        %v153 = vshrl.u32 %v150, 6
        %v154 = vor.u32 %v152, %v153
        %v155 = vxor.u32 %v151, %v154
        %v156 = vadd.s32 %v151, %v155
        %v157 = vshll.u32 %v155, 6
        %v158 = vshrl.u32 %v155, 26
        %v159 = vor.u32 %v157, %v158
        %v160 = vxor.u32 %v156, %v159
        %v161 = vadd.s32 %v156, %v137
        %v162 = vadd.s32 %v160, %v139
        %v163 = vadd.s32 %v162, 1
        %v164 = vadd.s32 %v161, %v163
        %v165 = vshll.u32 %v163, 17
        %v166 = vshrl.u32 %v163, 15
        %v167 = vor.u32 %v165, %v166
        %v168 = vxor.u32 %v164, %v167
        %v169 = vadd.s32 %v164, %v168
        %v170 = vshll.u32 %v168, 29
        %v171 = vshrl.u32 %v168, 3
        %v172 = vor.u32 %v170, %v171
        %v173 = vxor.u32 %v169, %v172
        %v174 = vadd.s32 %v169, %v173
        %v175 = vshll.u32 %v173, 16
        %v176 = vshrl.u32 %v173, 16
        %v177 = vor.u32 %v175, %v176
        %v178 = vxor.u32 %v174, %v177
        %v179 = vadd.s32 %v174, %v178
        %v180 = vshll.u32 %v178, 24
        %v181 = vshrl.u32 %v178, 8
        %v182 = vor.u32 %v180, %v181
        %v183 = vxor.u32 %v179, %v182
        %v184 = vadd.s32 %v179, %v139
        %v185 = vadd.s32 %v183, %v137
        %v186 = vadd.s32 %v185, 2
        %v187 = vadd.s32 %v184, %v186
        %v188 = vshll.u32 %v186, 13
        %v189 = vshrl.u32 %v186, 19
        %v190 = vor.u32 %v188, %v189
        %v191 = vxor.u32 %v187, %v190
        %v192 = vadd.s32 %v187, %v191
        %v193 = vshll.u32 %v191, 15
        %v194 = vshrl.u32 %v191, 17
        %v195 = vor.u32 %v193, %v194
        %v196 = vxor.u32 %v192, %v195
        %v197 = vadd.s32 %v192, %v196
        %v198 = vshll.u32 %v196, 26
        %v199 = vshrl.u32 %v196, 6
        %v200 = vor.u32 %v198, %v199
        %v201 = vxor.u32 %v197, %v200
        %v202 = vadd.s32 %v197, %v201
        %v203 = vshll.u32 %v201, 6
        %v204 = vshrl.u32 %v201, 26
        %v205 = vor.u32 %v203, %v204
        %v206 = vxor.u32 %v202, %v205
        %v207 = vadd.s32 %v202, %v137
        %v208 = vadd.s32 %v206, %v137
        %v209 = vadd.s32 %v208, 3
        %v210 = vadd.s32 %v207, %v209
        %v211 = vshll.u32 %v209, 17
        %v212 = vshrl.u32 %v209, 15
        %v213 = vor.u32 %v211, %v212
        %v214 = vxor.u32 %v210, %v213
        %v215 = vadd.s32 %v210, %v214
        %v216 = vshll.u32 %v214, 29
        %v217 = vshrl.u32 %v214, 3
        %v218 = vor.u32 %v216, %v217
        %v219 = vxor.u32 %v215, %v218
        %v220 = vadd.s32 %v215, %v219
        %v221 = vshll.u32 %v219, 16
        %v222 = vshrl.u32 %v219, 16
        %v223 = vor.u32 %v221, %v222
        %v224 = vxor.u32 %v220, %v223
        %v225 = vadd.s32 %v220, %v224
        %v226 = vshll.u32 %v224, 24
        %v227 = vshrl.u32 %v224, 8
        %v228 = vor.u32 %v226, %v227
        %v229 = vxor.u32 %v225, %v228
        %v230 = vadd.s32 %v225, %v137
        %v231 = vadd.s32 %v229, %v139
        %v232 = vadd.s32 %v231, 4
        %v233 = vadd.s32 %v230, %v232
        %v234 = vshll.u32 %v232, 13
        %v235 = vshrl.u32 %v232, 19
        %v236 = vor.u32 %v234, %v235
        %v237 = vxor.u32 %v233, %v236
        %v238 = vadd.s32 %v233, %v237
        %v239 = vshll.u32 %v237, 15
        %v240 = vshrl.u32 %v237, 17
        %v241 = vor.u32 %v239, %v240
        %v242 = vxor.u32 %v238, %v241
        %v243 = vadd.s32 %v238, %v242
        %v244 = vshll.u32 %v242, 26
        %v245 = vshrl.u32 %v242, 6
        %v246 = vor.u32 %v244, %v245
        %v247 = vxor.u32 %v243, %v246
        %v248 = vadd.s32 %v243, %v247
        %v249 = vshll.u32 %v247, 6
        %v250 = vshrl.u32 %v247, 26
        %v251 = vor.u32 %v249, %v250
        %v252 = vxor.u32 %v248, %v251
        %v253 = vadd.s32 %v248, %v139
        %v254 = vadd.s32 %v252, %v137
        %v255 = vadd.s32 %v254, 5
        %v256 = vxor.u32 %v253, %v255
        %257 = set.rngseed %v256
        %v258 = vrng
        %v259 = vand.u32 %v258, 2147483647
        %vm260 = vcmp.ge.s32.totalorder %v259, 429496730
        %v261 = vld [vmem:[%s115] sm:$0xff]
        %v262 = vmul.f32 %v261, 1.25
        %v263 = vsel %vm260, %v262, 0.0
        %264 = vst [vmem:[%s133] sm:$0xff] %v263
        %s265 = sand.u32 %s54, 1
        %s266 = scalar_lea.sflag [#allocation6], %s265
        %s267 = sand.u32 %s54, 1
        %s268 = smul.addr %s267, 8
        %s269 = scalar_lea.vmem [#allocation7], %s268
        // Predicated region
        $region29: #{tpu_custom_call.1} parent=23 // pred_check
          %p270 = pneg %p64
        $region30: #{tpu_custom_call.1} parent=23 // pred_check_branch
          %272 = sbr.rel (%p270) target = $region32
        $region31: #{tpu_custom_call.1} parent=23 // pred_region
          %s274 = ssub.s32 128, 128
          %275 = vsyncadd %s266, %s274
          %s276 = smul.addr %s20, 128
          %s277 = scalar_lea.hbm %s2, %s276
          %s279 = sshll.u32 %s269, 4
          %s280 = int_to_ptr.vmem [resolvable:$true] %s279
          %282 = dma.vmem_to_hbm [thread:$0]  %s280, 128, %s277, %s266
        $region32: #{tpu_custom_call.1} parent=23 // pred_fallthru
          _
      $region24: #{tpu_custom_call.1} parent=5 // pred_fallthru
        _
      %p283 = scmp.le.s32.totalorder 2, %s15
      // Predicated region
      $region33: #{tpu_custom_call.1} parent=5 // pred_check
        %p284 = pneg %p283
      $region34: #{tpu_custom_call.1} parent=5 // pred_check_branch
        %286 = sbr.rel (%p284) target = $region36
      $region35: #{tpu_custom_call.1} parent=5 // pred_region
        %s287 = ssub.s32 %s15, 2
        // Predicated region
        $region37: #{tpu_custom_call.1} parent=35 // pred_check
          %p288 = pneg %p70
        $region38: #{tpu_custom_call.1} parent=35 // pred_check_branch
          %290 = sbr.rel (%p288) target = $region40
        $region39: #{tpu_custom_call.1} parent=35 // pred_region
          %s291 = sand.u32 %s55, 1
          %s292 = scalar_lea.sflag [#allocation6], %s291
          %s293 = sand.u32 %s55, 1
          %s294 = smul.addr %s293, 8
          %s295 = scalar_lea.vmem [#allocation7], %s294
          %296 = dma.done %s292, 128
        $region40: #{tpu_custom_call.1} parent=35 // pred_fallthru
          _
      $region36: #{tpu_custom_call.1} parent=5 // pred_fallthru
        _
    $region6: #{tpu_custom_call.1} parent=1 // loop_footer
      %s19 = sadd.s32 1, %s15
    $region7: #{tpu_custom_call.1} parent=1 // loop_footer_branch
      %14 = sbr.rel target = $region3
    $region8: #{tpu_custom_call.1} parent=1 // loop_exit
      _
    %297 = vsyncpa [#allocation5], 1
    %s298 = scalar_lea.sflag [#allocation5], 1
    %299 = vsyncpa %s298, 1
    %300 = vsyncpa [#allocation6], 1
    %s301 = scalar_lea.sflag [#allocation6], 1
    %302 = vsyncpa %s301, 1

// kernel: tpu_custom_call.1
$region0: #{tpu_custom_call.1}
  #allocation0 [shape = 'u32[]', space=smem, size = 0x4, offset = 0x4, fixed_abs, tag = 'smem constant byte address 0x4 - core index']
  #allocation1 [shape = 'u32[144,128]{1,0:T(1,128)}', space=vmem, size = 0x12000, scoped, tag = 'internal scratch']
  #allocation2 [shape = 's32[1]{0}', space=sflag, size = 0x4, scoped, tag = 'scoped memory for tpu_custom_call.1']
  #allocation3 [shape = 's32[1]{0:T(128)S(6)}', space=smem, size = 0x200, scoped, tag = 'prefetched SMEM operand 0']
  %s0 = inlined_call_operand.<no memory space> [shape: s32[1], index: 0, kind: input, shape index: {}]
  %s1 = inlined_call_operand.hbm [shape: f32[16,128], index: 1, kind: input, shape index: {}]
  %s2 = inlined_call_operand.hbm [shape: f32[16,128], index: 2, kind: output, shape index: {}]
  %s3 = sld [smem:[#allocation0]]
  $region41: #{tpu_custom_call.1} parent=0
    _
  %s5 = ssub.s32 1, %s3
  %s6 = scalar_select 0, %s5, %s3
  %7 = sst [smem:[#allocation3]] %s0
  $region1: #{tpu_custom_call.1} parent=0
    #allocation4 [shape = 'u8[8192]{0}', space=vmem, size = 0x2000, scoped, tag = 'input window, operand 1']
    #allocation5 [shape = 's32[2]{0}', space=sflag, size = 0x8, scoped, tag = 'scoped memory for tpu_custom_call.1']
    #allocation6 [shape = 's32[2]{0}', space=sflag, size = 0x8, scoped, tag = 'scoped memory for tpu_custom_call.1']
    #allocation7 [shape = 'u8[8192]{0}', space=vmem, size = 0x2000, scoped, tag = 'output window, operand 0']
    %8 = vsyncpa [#allocation5], 0
    %s9 = scalar_lea.sflag [#allocation5], 1
    %10 = vsyncpa %s9, 0
    %11 = vsyncpa [#allocation6], 0
    %s12 = scalar_lea.sflag [#allocation6], 1
    %13 = vsyncpa %s12, 0
    loop: start=0, step=1, limit=4
    $region2: #{tpu_custom_call.1} parent=1 // loop_pre_header
      _
    $region3: #{tpu_custom_call.1} parent=1 // loop_header
      %s15 = sphi 0, %s19
      %p16 = scmp.ge.s32.totalorder %s15, 4
      %s25 = sphi 0, %s27
      %s28 = sphi 0, %s25
      %s29 = sphi 0, %s28
      %s45 = sphi 0, %s29
      %s51 = sphi 0, %s53
      %s54 = sphi 0, %s51
      %s55 = sphi 0, %s54
      %s71 = sphi 0, %s55
    $region4: #{tpu_custom_call.1} parent=1 // loop_header_branch
      %18 = sbr.rel (%p16) target = $region8
    $region5: #{tpu_custom_call.1} parent=1 // loop_body
      %s20 = ssub.s32 %s15, 1
      %s21 = ssub.s32 %s15, 2
      %s22 = sadd.s32 %s15, 1
      %s23 = ssub.s32 %s15, %s22
      %p24 = scmp.eq.s32.totalorder %s23, 0
      %s26 = sadd.s32 %s25, 1
      %s27 = scalar_select %p24, %s25, %s26
      %p30 = pneg %p24
      %p31 = scmp.eq.s32.totalorder %s15, 1
      %p32 = por %p30, %p31
      %p33 = scmp.ne.s32.totalorder %s25, %s28
      %p34 = scmp.eq.s32.totalorder %s15, 0
      %p35 = por %p33, %p34
      %p36 = scmp.ne.s32.totalorder %s25, %s28
      %p37 = scmp.eq.s32.totalorder %s20, 1
      %p38 = por %p36, %p37
      %p39 = scmp.ne.s32.totalorder %s28, %s29
      %p40 = scmp.eq.s32.totalorder %s20, 0
      %p41 = por %p39, %p40
      %p42 = scmp.ne.s32.totalorder %s28, %s29
      %p43 = scmp.eq.s32.totalorder %s21, 1
      %p44 = por %p42, %p43
      %p46 = scmp.ne.s32.totalorder %s29, %s45
      %p47 = scmp.eq.s32.totalorder %s21, 0
      %p48 = por %p46, %p47
      %s49 = ssub.s32 %s15, %s22
      %p50 = scmp.eq.s32.totalorder %s49, 0
      %s52 = sadd.s32 %s51, 1
      %s53 = scalar_select %p50, %s51, %s52
      %p56 = pneg %p50
      %p57 = scmp.eq.s32.totalorder %s15, 1
      %p58 = por %p56, %p57
      %p59 = scmp.ne.s32.totalorder %s51, %s54
      %p60 = scmp.eq.s32.totalorder %s15, 0
      %p61 = por %p59, %p60
      %p62 = scmp.ne.s32.totalorder %s51, %s54
      %p63 = scmp.eq.s32.totalorder %s20, 1
      %p64 = por %p62, %p63
      %p65 = scmp.ne.s32.totalorder %s54, %s55
      %p66 = scmp.eq.s32.totalorder %s20, 0
      %p67 = por %p65, %p66
      %p68 = scmp.ne.s32.totalorder %s54, %s55
      %p69 = scmp.eq.s32.totalorder %s21, 1
      %p70 = por %p68, %p69
      %p72 = scmp.ne.s32.totalorder %s55, %s71
      %p73 = scmp.eq.s32.totalorder %s21, 0
      %p74 = por %p72, %p73
      %p75 = scmp.le.s32.totalorder 1, %s15
      %p76 = scmp.lt.s32.totalorder %s15, 3
      %p77 = pnand %p75, %p76
      %p78 = pneg %p77
      // Predicated region
      $region9: #{tpu_custom_call.1} parent=5 // pred_check
        _
      $region10: #{tpu_custom_call.1} parent=5 // pred_check_branch
        %80 = sbr.rel (%p77) target = $region12
      $region11: #{tpu_custom_call.1} parent=5 // pred_region
        %s81 = ssub.s32 %s15, 1
      $region12: #{tpu_custom_call.1} parent=5 // pred_fallthru
        _
      %p82 = scmp.lt.s32.totalorder %s15, 2
      // Predicated region
      $region13: #{tpu_custom_call.1} parent=5 // pred_check
        %p83 = pneg %p82
      $region14: #{tpu_custom_call.1} parent=5 // pred_check_branch
        %85 = sbr.rel (%p83) target = $region16
      $region15: #{tpu_custom_call.1} parent=5 // pred_region
        // Predicated region
        $region17: #{tpu_custom_call.1} parent=15 // pred_check
          %p86 = pneg %p35
        $region18: #{tpu_custom_call.1} parent=15 // pred_check_branch
          %88 = sbr.rel (%p86) target = $region20
        $region19: #{tpu_custom_call.1} parent=15 // pred_region
          %s89 = sand.u32 %s25, 1
          %s90 = scalar_lea.sflag [#allocation5], %s89
          %s91 = sand.u32 %s25, 1
          %s92 = smul.addr %s91, 8
          %s93 = scalar_lea.vmem [#allocation4], %s92
          %s95 = ssub.s32 128, 128
          %96 = vsyncadd %s90, %s95
          %s97 = smul.addr %s15, 128
          %s98 = scalar_lea.hbm %s1, %s97
          %s100 = sshll.u32 %s93, 4
          %s101 = int_to_ptr.vmem [resolvable:$true] %s100
          %103 = dma.hbm_to_vmem [thread:$0]  %s98, 128, %s101, %s90
        $region20: #{tpu_custom_call.1} parent=15 // pred_fallthru
          _
      $region16: #{tpu_custom_call.1} parent=5 // pred_fallthru
        _
      %p104 = scmp.le.s32.totalorder 1, %s15
      %p105 = scmp.lt.s32.totalorder %s15, 3
      %p106 = pnand %p104, %p105
      %p107 = pneg %p106
      // Predicated region
      $region21: #{tpu_custom_call.1} parent=5 // pred_check
        _
      $region22: #{tpu_custom_call.1} parent=5 // pred_check_branch
        %109 = sbr.rel (%p106) target = $region24
      $region23: #{tpu_custom_call.1} parent=5 // pred_region
        %s110 = ssub.s32 %s15, 1
        %s111 = sand.u32 %s28, 1
        %s112 = scalar_lea.sflag [#allocation5], %s111
        %s113 = sand.u32 %s28, 1
        %s114 = smul.addr %s113, 8
        %s115 = scalar_lea.vmem [#allocation4], %s114
        // Predicated region
        $region25: #{tpu_custom_call.1} parent=23 // pred_check
          %p116 = pneg %p41
        $region26: #{tpu_custom_call.1} parent=23 // pred_check_branch
          %118 = sbr.rel (%p116) target = $region28
        $region27: #{tpu_custom_call.1} parent=23 // pred_region
          %119 = dma.done %s112, 128
        $region28: #{tpu_custom_call.1} parent=23 // pred_fallthru
          _
        %s120 = sand.u32 %s28, 1
        %s121 = scalar_lea.sflag [#allocation5], %s120
        %s122 = sand.u32 %s28, 1
        %s123 = smul.addr %s122, 8
        %s124 = scalar_lea.vmem [#allocation4], %s123
        %p125 = pneg %p41
        %p126 = pneg %p38
        %p127 = pneg %p67
        %p128 = pneg %p64
        %s129 = sand.u32 %s54, 1
        %s130 = scalar_lea.sflag [#allocation6], %s129
        %s131 = sand.u32 %s54, 1
        %s132 = smul.addr %s131, 8
        %s133 = scalar_lea.vmem [#allocation7], %s132
        %v134 = vlaneseq
        %v135 = vshrl.u32 %v134, 7
        %v136 = vlaneseq
        %v137 = vand.u32 %v136, 127
        %v138 = vmul.u32 %v135, 128
        %v139 = vadd.s32 %v138, %v137
        %s140 = sld [smem:[#allocation3]]
        %s141 = smul.u32 %s20, 2654435769
        %s142 = sxor.u32 %s140, %s141
        %v143 = vstv %s142
        %v144 = vxor.u32 %v139, %v143
        %v145 = vshrl.u32 %v144, 16
        %v146 = vxor.u32 %v144, %v145
        %v147 = vmul.u32 %v146, 2146121005
        %v148 = vshrl.u32 %v147, 15
        %v149 = vxor.u32 %v147, %v148
        %v150 = vmul.u32 %v149, 2221713035
        %v151 = vshrl.u32 %v150, 16
        %v152 = vxor.u32 %v150, %v151
        %vm153 = vcmp.ge.u32.totalorder %v152, 858993459
        %v154 = vld [vmem:[%s115] sm:$0xff]
        %v155 = vmul.f32 %v154, 1.25
        %v156 = vsel %vm153, %v155, 0.0
        %157 = vst [vmem:[%s133] sm:$0xff] %v156
        %s158 = sand.u32 %s54, 1
        %s159 = scalar_lea.sflag [#allocation6], %s158
        %s160 = sand.u32 %s54, 1
        %s161 = smul.addr %s160, 8
        %s162 = scalar_lea.vmem [#allocation7], %s161
        // Predicated region
        $region29: #{tpu_custom_call.1} parent=23 // pred_check
          %p163 = pneg %p64
        $region30: #{tpu_custom_call.1} parent=23 // pred_check_branch
          %165 = sbr.rel (%p163) target = $region32
        $region31: #{tpu_custom_call.1} parent=23 // pred_region
          %s167 = ssub.s32 128, 128
          %168 = vsyncadd %s159, %s167
          %s169 = smul.addr %s20, 128
          %s170 = scalar_lea.hbm %s2, %s169
          %s172 = sshll.u32 %s162, 4
          %s173 = int_to_ptr.vmem [resolvable:$true] %s172
          %175 = dma.vmem_to_hbm [thread:$0]  %s173, 128, %s170, %s159
        $region32: #{tpu_custom_call.1} parent=23 // pred_fallthru
          _
      $region24: #{tpu_custom_call.1} parent=5 // pred_fallthru
        _
      %p176 = scmp.le.s32.totalorder 2, %s15
      // Predicated region
      $region33: #{tpu_custom_call.1} parent=5 // pred_check
        %p177 = pneg %p176
      $region34: #{tpu_custom_call.1} parent=5 // pred_check_branch
        %179 = sbr.rel (%p177) target = $region36
      $region35: #{tpu_custom_call.1} parent=5 // pred_region
        %s180 = ssub.s32 %s15, 2
        // Predicated region
        $region37: #{tpu_custom_call.1} parent=35 // pred_check
          %p181 = pneg %p70
        $region38: #{tpu_custom_call.1} parent=35 // pred_check_branch
          %183 = sbr.rel (%p181) target = $region40
        $region39: #{tpu_custom_call.1} parent=35 // pred_region
          %s184 = sand.u32 %s55, 1
          %s185 = scalar_lea.sflag [#allocation6], %s184
          %s186 = sand.u32 %s55, 1
          %s187 = smul.addr %s186, 8
          %s188 = scalar_lea.vmem [#allocation7], %s187
          %189 = dma.done %s185, 128
        $region40: #{tpu_custom_call.1} parent=35 // pred_fallthru
          _
      $region36: #{tpu_custom_call.1} parent=5 // pred_fallthru
        _
    $region6: #{tpu_custom_call.1} parent=1 // loop_footer
      %s19 = sadd.s32 1, %s15
    $region7: #{tpu_custom_call.1} parent=1 // loop_footer_branch
      %14 = sbr.rel target = $region3
    $region8: #{tpu_custom_call.1} parent=1 // loop_exit
      _
    %190 = vsyncpa [#allocation5], 1
    %s191 = scalar_lea.sflag [#allocation5], 1
    %192 = vsyncpa %s191, 1
    %193 = vsyncpa [#allocation6], 1
    %s194 = scalar_lea.sflag [#allocation6], 1
    %195 = vsyncpa %s194, 1

</llo_original>
